<compile_context>
chip_gen: v7x
topology: tpu7x:2x2x1
jax: 0.10.0
libtpu: 0.0.40
codegen_flags: <defaults>
</compile_context>

<pallas_src>
import functools
import math

import jax
import jax.numpy as jnp
from jax.experimental import pallas as pl
from jax.experimental.pallas import tpu as pltpu

LANE = 128              # vreg lane count (last dim)
SUBLANE = 8             # vreg sublane count (second-to-last dim, f32)
ACC_ROWS = 32           # accumulator rows -> 4 independent f32 vreg add chains
MAX_BLOCK_ROWS = 4096   # (4096,128) f32 tile = 2 MiB (two-pass path)
FUSED_MAX_BYTES = 4 * 1024 * 1024   # x slab size below which the fused path is used
VMEM_LIMIT = 32 * 1024 * 1024       # safe scoped-VMEM limit on v5e/v6e/v7x


def _round_up(n, m):
    return ((n + m - 1) // m) * m


def _acc_rows_for(nrows):
    """Pick the accumulator row count used to fold a (nrows, LANE) tile."""
    for r in (ACC_ROWS, SUBLANE):
        if nrows > r and nrows % r == 0:
            return r
    return nrows


# --------------------------------------------------------------------------
# Fused path: whole activation resident in VMEM (one kernel, one HBM read).
# --------------------------------------------------------------------------
def _fused_kernel(x_ref, o_ref, step_ref, *, qp, inv_numel, two_inv_sqrt_qp,
                  rows, acc_rows):
    a = jnp.abs(x_ref[...])                               # (rows, LANE)
    if acc_rows < rows:
        # Fold the row axis with plain VPU adds (independent chains per vreg);
        # the expensive cross-lane/sublane reduce happens only once below.
        a = a.reshape(rows // acc_rows, acc_rows, LANE).sum(axis=0)
    abs_sum = jnp.sum(a)

    # step_size = 2 * mean(|x|) / sqrt(Qp); padded zeros contribute 0 to the
    # sum and the divisor is the original numel, so the mean stays correct.
    s = abs_sum * inv_numel * two_inv_sqrt_qp
    inv_s = 1.0 / s
    step_ref[0, 0] = s

    # NOTE: all-zero input gives s == 0 and NaN output, matching the PyTorch
    # module (value / 0) for parity.
    v_bar = jnp.clip(jnp.round(x_ref[...] * inv_s), 0.0, qp)
    o_ref[...] = (v_bar * s).astype(o_ref.dtype)


# --------------------------------------------------------------------------
# Two-pass path (activation larger than the fused VMEM budget).
# --------------------------------------------------------------------------
def _abs_sum_kernel(x_ref, out_ref, acc_ref, *, block_rows, valid_rows,
                    num_blocks, nb, need_mask, acc_rows):
    """Accumulate sum(|x|) into a VMEM vector accumulator; flush to SMEM at the end."""
    c = pl.program_id(0)          # core-split axis ("parallel")
    i = pl.program_id(1)          # row-block reduction axis ("arbitrary")

    @pl.when(i == 0)
    def _():
        acc_ref[...] = jnp.zeros_like(acc_ref)

    def _fold(a):
        if acc_rows < block_rows:
            return a.reshape(block_rows // acc_rows, acc_rows, LANE).sum(axis=0)
        return a

    if need_mask:
        blk = c * nb + i
        is_partial = blk == num_blocks - 1

        @pl.when(is_partial)
        def _():
            # Mask rows past the end of the (rows, LANE) slab (partial last block).
            row0 = blk * block_rows
            row_ids = row0 + jax.lax.broadcasted_iota(
                jnp.int32, (block_rows, LANE), 0)
            a = jnp.where(row_ids < valid_rows, jnp.abs(x_ref[...]), 0.0)
            acc_ref[...] += _fold(a)

        @pl.when(jnp.logical_not(is_partial))
        def _():
            acc_ref[...] += _fold(jnp.abs(x_ref[...]))
    else:
        acc_ref[...] += _fold(jnp.abs(x_ref[...]))

    @pl.when(i == nb - 1)
    def _():
        out_ref[0, 0] = jnp.sum(acc_ref[...])


def _quant_kernel(part_ref, x_ref, o_ref, *, qp, inv_numel, two_inv_sqrt_qp,
                  n_split):
    """Unsigned LSQ fake-quant; step size derived in-kernel from SMEM partials."""
    abs_sum = part_ref[0, 0]
    for c in range(1, n_split):          # statically unrolled (n_split <= 2)
        abs_sum = abs_sum + part_ref[c, 0]
    s = abs_sum * inv_numel * two_inv_sqrt_qp
    inv_s = 1.0 / s
    v_bar = jnp.clip(jnp.round(x_ref[...] * inv_s), 0.0, qp)
    o_ref[...] = (v_bar * s).astype(o_ref.dtype)


# --------------------------------------------------------------------------
# Wrapper
# --------------------------------------------------------------------------
def act_lsq_forward(x, nbits=4):
    """Forward pass of ActLSQ (first call, init_state==0) implemented with Pallas."""
    qp = float(2 ** nbits - 1)
    orig_shape = x.shape
    numel = int(x.size)
    x = x.astype(jnp.float32)

    inv_numel = 1.0 / numel
    two_inv_sqrt_qp = 2.0 / math.sqrt(qp)

    # ---- View as a lane-dense (rows, 128) slab (zero-copy in the common case) ----
    flat = x.reshape(-1)
    pad = (-numel) % LANE
    if pad:
        # Rare ragged tail (< 128 extra elements): pad once so the 2-D reshape
        # is legal.  TODO(synk): handle the partial last row with an in-kernel
        # lane mask to avoid this extra HBM pad/slice round-trip.
        flat = jnp.pad(flat, (0, pad))
    rows = flat.size // LANE
    x2d = flat.reshape(rows, LANE)

    if rows * LANE * 4 <= FUSED_MAX_BYTES:
        # ---------------- Fused single-kernel path ----------------
        acc_rows = _acc_rows_for(rows)
        x_q2d, step2d = pl.pallas_call(
            functools.partial(_fused_kernel, qp=qp, inv_numel=inv_numel,
                              two_inv_sqrt_qp=two_inv_sqrt_qp,
                              rows=rows, acc_rows=acc_rows),
            out_shape=(jax.ShapeDtypeStruct((rows, LANE), jnp.float32),
                       jax.ShapeDtypeStruct((1, 1), jnp.float32)),
            in_specs=[pl.BlockSpec(memory_space=pltpu.VMEM)],
            out_specs=(pl.BlockSpec(memory_space=pltpu.VMEM),
                       pl.BlockSpec(memory_space=pltpu.SMEM)),
            compiler_params=pltpu.CompilerParams(vmem_limit_bytes=VMEM_LIMIT),
        )(x2d)
        step_size = step2d.reshape(1)
    else:
        # ---------------- Two-pass tiled path ----------------
        # Choose block_rows so num_blocks is even (both v7x TCs get work) and
        # each tile has at most MAX_BLOCK_ROWS rows.
        nb_per_core = -(-rows // (2 * MAX_BLOCK_ROWS))          # ceil
        block_rows = _round_up(-(-rows // (2 * nb_per_core)), SUBLANE)
        block_rows = min(block_rows, rows)
        num_blocks = -(-rows // block_rows)
        need_mask = (rows % block_rows) != 0
        n_split = 2 if (num_blocks % 2 == 0 and num_blocks >= 2) else 1
        nb = num_blocks // n_split
        acc_rows = _acc_rows_for(block_rows)

        # Pass 1: per-core partial sums of |x|.
        partials = pl.pallas_call(
            functools.partial(_abs_sum_kernel, block_rows=block_rows,
                              valid_rows=rows, num_blocks=num_blocks, nb=nb,
                              need_mask=need_mask, acc_rows=acc_rows),
            out_shape=jax.ShapeDtypeStruct((n_split, 1), jnp.float32),
            grid=(n_split, nb),
            in_specs=[pl.BlockSpec((block_rows, LANE),
                                   lambda c, i: (c * nb + i, 0))],
            out_specs=pl.BlockSpec((1, 1), lambda c, i: (c, 0),
                                   memory_space=pltpu.SMEM),
            scratch_shapes=[pltpu.VMEM((acc_rows, LANE), jnp.float32)],
            compiler_params=pltpu.CompilerParams(
                dimension_semantics=("parallel", "arbitrary"),
                vmem_limit_bytes=VMEM_LIMIT),
        )(x2d)

        # Pass 2: elementwise fake-quantization; step size derived in-kernel
        # from the raw partials (no tiny XLA reductions on the critical path).
        x_q2d = pl.pallas_call(
            functools.partial(_quant_kernel, qp=qp, inv_numel=inv_numel,
                              two_inv_sqrt_qp=two_inv_sqrt_qp, n_split=n_split),
            out_shape=jax.ShapeDtypeStruct((rows, LANE), jnp.float32),
            grid=(num_blocks,),
            in_specs=[
                pl.BlockSpec(memory_space=pltpu.SMEM),               # partials
                pl.BlockSpec((block_rows, LANE), lambda i: (i, 0)),  # x tile
            ],
            out_specs=pl.BlockSpec((block_rows, LANE), lambda i: (i, 0)),
            compiler_params=pltpu.CompilerParams(
                dimension_semantics=("parallel",),
                vmem_limit_bytes=VMEM_LIMIT),
        )(partials, x2d)

        # Returned step_size (off the pass-2 critical path), same op order as
        # the in-kernel derivation.
        step_size = (jnp.sum(partials) * jnp.float32(inv_numel)
                     * jnp.float32(two_inv_sqrt_qp)).reshape(1)

    if pad:
        x_q = x_q2d.reshape(-1)[:numel].reshape(orig_shape)
    else:
        x_q = x_q2d.reshape(orig_shape)
    return x_q, step_size


def _reference(x, nbits=4):
    """Pure-JAX reference mirroring the PyTorch module."""
    qp = 2 ** nbits - 1
    step = 2.0 * jnp.mean(jnp.abs(x)) / math.sqrt(qp)
    v_bar = jnp.clip(jnp.round(x / step), 0.0, float(qp))
    return v_bar * step, step.reshape(1)


if __name__ == "__main__":
    nbits = 4

    # Small NCHW conv activation -> exercises the fused single-kernel path.
    x_small = jax.random.normal(jax.random.PRNGKey(0), (2, 4, 16, 16),
                                dtype=jnp.float32)
    # Larger activation -> exercises the two-pass tiled path, including the
    # masked partial last block (rows = 8200, block_rows = 2056).
    x_large = jax.random.normal(jax.random.PRNGKey(1), (5, 41, 64, 80),
                                dtype=jnp.float32)

    for name, x in (("small", x_small), ("large", x_large)):
        x_q, step_size = act_lsq_forward(x, nbits=nbits)
        x_q = jax.block_until_ready(x_q)
        step_size = jax.block_until_ready(step_size)

        x_q_ref, step_ref = _reference(x, nbits=nbits)
        assert jnp.allclose(step_size, step_ref, rtol=1e-5, atol=1e-7), \
            f"{name}: step_size mismatch"

        # x * (1/s) vs x / s (and a ~1-ULP step-size delta) can flip the
        # quantized code by one level exactly at a rounding tie (difference ==
        # step_size).  Accept exact matches and rare tie flips.
        abs_err = jnp.abs(x_q - x_q_ref)
        exact = abs_err <= 1e-5
        tie_flip = jnp.abs(abs_err - step_ref[0]) <= 1e-4
        assert bool(jnp.all(exact | tie_flip)), f"{name}: quantized output mismatch"
        assert int(jnp.sum(~exact)) <= max(4, x.size // 10000), \
            f"{name}: too many rounding-tie mismatches"

    print("KERNEL_OK")
</pallas_src>

<mosaic_0001>
module attributes {stable_mosaic.version = 11 : i64} {
  func.func @_fused_kernel(%arg0: memref<16x128xf32, #tpu.memory_space<vmem>>, %arg1: memref<16x128xf32, #tpu.memory_space<vmem>>, %arg2: memref<1x1xf32, #tpu.memory_space<smem>>) attributes {dimension_semantics = [], scalar_prefetch = 0 : i64, scratch_operands = 0 : i64, tpu.core_type = #tpu.core_type<tc>} {
    %c0 = arith.constant 0 : index
    %c0_0 = arith.constant 0 : index
    %0 = vector.load %arg0[%c0, %c0_0] : memref<16x128xf32, #tpu.memory_space<vmem>>, vector<16x128xf32>
    %1 = math.absf %0 : vector<16x128xf32>
    %2 = vector.shape_cast %1 : vector<16x128xf32> to vector<2x8x128xf32>
    %cst = arith.constant dense<0.000000e+00> : vector<8x128xf32>
    %3 = vector.multi_reduction <add>, %2, %cst [0] : vector<2x8x128xf32> to vector<8x128xf32>
    %4 = vector.shape_cast %3 : vector<8x128xf32> to vector<1x8x128xf32>
    %cst_1 = arith.constant dense<0.000000e+00> : vector<1xf32>
    %5 = vector.multi_reduction <add>, %4, %cst_1 [1, 2] : vector<1x8x128xf32> to vector<1xf32>
    %6 = vector.shape_cast %5 : vector<1xf32> to vector<1x1x1xf32>
    %7 = vector.extract %6[0, 0, 0] : f32 from vector<1x1x1xf32>
    %cst_2 = arith.constant 4.8828125E-4 : f32
    %8 = arith.mulf %7, %cst_2 : f32
    %cst_3 = arith.constant 0.516397774 : f32
    %9 = arith.mulf %8, %cst_3 : f32
    %cst_4 = arith.constant 1.000000e+00 : f32
    %10 = arith.divf %cst_4, %9 : f32
    %c0_5 = arith.constant 0 : index
    %c0_6 = arith.constant 0 : index
    %11 = memref.load %arg2[%c0_5, %c0_6] : memref<1x1xf32, #tpu.memory_space<smem>>
    memref.store %9, %arg2[%c0_5, %c0_6] : memref<1x1xf32, #tpu.memory_space<smem>>
    %c0_7 = arith.constant 0 : index
    %c0_8 = arith.constant 0 : index
    %12 = vector.load %arg0[%c0_7, %c0_8] : memref<16x128xf32, #tpu.memory_space<vmem>>, vector<16x128xf32>
    %13 = vector.broadcast %10 : f32 to vector<16x128xf32>
    %14 = arith.mulf %12, %13 : vector<16x128xf32>
    %15 = math.roundeven %14 : vector<16x128xf32>
    %cst_9 = arith.constant 0.000000e+00 : f32
    %cst_10 = arith.constant 1.500000e+01 : f32
    %16 = vector.broadcast %cst_9 : f32 to vector<16x128xf32>
    %17 = arith.maximumf %16, %15 : vector<16x128xf32>
    %18 = vector.broadcast %cst_10 : f32 to vector<16x128xf32>
    %19 = arith.minimumf %18, %17 : vector<16x128xf32>
    %20 = vector.broadcast %9 : f32 to vector<16x128xf32>
    %21 = arith.mulf %19, %20 : vector<16x128xf32>
    %c0_11 = arith.constant 0 : index
    %c0_12 = arith.constant 0 : index
    %22 = vector.load %arg1[%c0_11, %c0_12] : memref<16x128xf32, #tpu.memory_space<vmem>>, vector<16x128xf32>
    tpu.vector_store %arg1[%c0_11, %c0_12], %21 {strides = array<i32>} : memref<16x128xf32, #tpu.memory_space<vmem>>, vector<16x128xf32>,
    return
  }
}

</mosaic_0001>

<llo_original>
// kernel: tpu_custom_call.1
$region0: #{tpu_custom_call.1}
  #allocation0 [shape = 'u32[]', space=smem, size = 0x4, offset = 0x4, fixed_abs, tag = 'smem constant byte address 0x4 - core index']
  #allocation1 [shape = 'u32[144,128]{1,0:T(1,128)}', space=vmem, size = 0x12000, scoped, tag = 'internal scratch']
  %s0 = inlined_call_operand.hbm [shape: f32[16,128], index: 0, kind: input, shape index: {}]
  %s1 = inlined_call_operand.hbm [shape: f32[16,128], index: 1, kind: output, shape index: {0}]
  %s2 = inlined_call_operand.hbm [shape: f32[1,1], index: 2, kind: output, shape index: {1}]
  %3 = xla_tuple %s1, %s2
  %s4 = sld [smem:[#allocation0]]
  $region26: #{tpu_custom_call.1} parent=0
    _
  %s6 = ssub.s32 1, %s4
  %s7 = scalar_select 0, %s6, %s4
  $region1: #{tpu_custom_call.1} parent=0
    #allocation2 [shape = 'u8[8192]{0}', space=vmem, size = 0x2000, scoped, tag = 'input window, operand 0, single buffered']
    #allocation3 [shape = 's32[1]{0}', space=sflag, size = 0x4, scoped, tag = 'scoped memory for tpu_custom_call.1']
    #allocation4 [shape = 's32[1]{0}', space=sflag, size = 0x4, scoped, tag = 'scoped memory for tpu_custom_call.1']
    #allocation5 [shape = 's32[1]{0}', space=sflag, size = 0x4, scoped, tag = 'scoped memory for tpu_custom_call.1']
    #allocation6 [shape = 'u8[8192]{0}', space=vmem, size = 0x2000, scoped, tag = 'output window, operand 0, single buffered']
    #allocation7 [shape = 'u8[512]{0}', space=smem, size = 0x200, scoped, tag = 'output window, operand 1, single buffered']
    %8 = vsyncpa [#allocation3], 0
    %9 = vsyncpa [#allocation4], 0
    %10 = vsyncpa [#allocation5], 0
    // Predicated region
    $region2: #{tpu_custom_call.1} parent=1 // pred_check
      _
    $region3: #{tpu_custom_call.1} parent=1 // pred_check_branch
      %12 = sbr.rel (0) target = $region5
    $region4: #{tpu_custom_call.1} parent=1 // pred_region
      %s14 = ssub.s32 256, 256
      %15 = vsyncadd [#allocation3], %s14
      %s16 = sshll.u32 [#allocation2], 4
      %s17 = int_to_ptr.vmem [resolvable:$true] %s16
      %22 = dma.hbm_to_vmem [thread:$0]  %s0, 256, %s17, [#allocation3], 128, 128, 8
    $region5: #{tpu_custom_call.1} parent=1 // pred_fallthru
      _
    // Predicated region
    $region6: #{tpu_custom_call.1} parent=1 // pred_check
      _
    $region7: #{tpu_custom_call.1} parent=1 // pred_check_branch
      %24 = sbr.rel (0) target = $region9
    $region8: #{tpu_custom_call.1} parent=1 // pred_region
      %25 = dma.done [#allocation3], 256
    $region9: #{tpu_custom_call.1} parent=1 // pred_fallthru
      _
    %v26 = vld [vmem:[#allocation2] sm:$0xff]
    %v27 = vld [vmem:[#allocation2 + $0x8] sm:$0xff]
    %v28 = vand.u32 2147483647, %v26
    %v29 = vand.u32 2147483647, %v27
    %v30 = vadd.f32 %v28, %v29
    %31 = vadd.xlane.f32.xlu0 %v30
    %v32 = vpop.xlane.xlu0 %31
    %v33 = vrot.slane %v32, 4
    %v34 = vadd.f32 %v32, %v33
    %v35 = vrot.slane %v34, 2
    %v36 = vadd.f32 %v34, %v35
    %v37 = vrot.slane %v36, 1
    %v38 = vadd.f32 %v36, %v37
    %s39 = vtos %v38
    %s40 = smul.f32 %s39, 0.00048828125
    %s41 = smul.f32 %s40, 0.5163978
    %v42 = vstv %s41
    %v43 = vrcp.pop %v42
    %s44 = vtos %v43
    %s45 = scalar_lea.smem [#allocation7], 0
    %46 = sst [smem:[%s45]] %s41
    %v47 = vld [vmem:[#allocation2] sm:$0xff]
    %v48 = vld [vmem:[#allocation2 + $0x8] sm:$0xff]
    %v49 = vstv %s44
    %v50 = vmul.f32 %v47, %v49
    %v51 = vmul.f32 %v48, %v49
    %v52 = vround.ne.pseudo %v50
    %v53 = vround.ne.pseudo %v51
    %v54 = vmax.f32 %v52, 0.0
    %v55 = vmax.f32 %v53, 0.0
    %v56 = vmin.f32 %v54, 15.0
    %v57 = vmin.f32 %v55, 15.0
    %v58 = vstv %s41
    %v59 = vmul.f32 %v56, %v58
    %v60 = vmul.f32 %v57, %v58
    %61 = vst [vmem:[#allocation6] sm:$0xff] %v59
    %62 = vst [vmem:[#allocation6 + $0x8] sm:$0xff] %v60
    // Predicated region
    $region10: #{tpu_custom_call.1} parent=1 // pred_check
      _
    $region11: #{tpu_custom_call.1} parent=1 // pred_check_branch
      %64 = sbr.rel (0) target = $region13
    $region12: #{tpu_custom_call.1} parent=1 // pred_region
      %s66 = ssub.s32 256, 256
      %67 = vsyncadd [#allocation4], %s66
      %s68 = sshll.u32 [#allocation6], 4
      %s69 = int_to_ptr.vmem [resolvable:$true] %s68
      %74 = dma.vmem_to_hbm [thread:$0]  %s69, 256, %s1, [#allocation4], 128, 128, 8
    $region13: #{tpu_custom_call.1} parent=1 // pred_fallthru
      _
    // Predicated region
    $region14: #{tpu_custom_call.1} parent=1 // pred_check
      _
    $region15: #{tpu_custom_call.1} parent=1 // pred_check_branch
      %76 = sbr.rel (0) target = $region17
    $region16: #{tpu_custom_call.1} parent=1 // pred_region
      %s78 = ssub.s32 16, 16
      %79 = vsyncadd [#allocation5], %s78
      %82 = dma.smem_to_hbm [#allocation7], 16, %s2, [#allocation5]
    $region17: #{tpu_custom_call.1} parent=1 // pred_fallthru
      _
    // Predicated region
    $region18: #{tpu_custom_call.1} parent=1 // pred_check
      _
    $region19: #{tpu_custom_call.1} parent=1 // pred_check_branch
      %84 = sbr.rel (0) target = $region21
    $region20: #{tpu_custom_call.1} parent=1 // pred_region
      %85 = dma.done [#allocation4], 256
    $region21: #{tpu_custom_call.1} parent=1 // pred_fallthru
      _
    // Predicated region
    $region22: #{tpu_custom_call.1} parent=1 // pred_check
      _
    $region23: #{tpu_custom_call.1} parent=1 // pred_check_branch
      %87 = sbr.rel (0) target = $region25
    $region24: #{tpu_custom_call.1} parent=1 // pred_region
      %88 = dma.done [#allocation5], 16
    $region25: #{tpu_custom_call.1} parent=1 // pred_fallthru
      _
    %89 = sfence
    %90 = vsyncpa [#allocation3], 1
    %91 = vsyncpa [#allocation4], 1
    %92 = vsyncpa [#allocation5], 1

</llo_original>
